<compile_context>
chip_gen: v7x
topology: tpu7x:2x2x1
jax: 0.10.0
libtpu: 0.0.40
codegen_flags: <defaults>
</compile_context>

<pallas_src>
import math

import jax
import jax.numpy as jnp
from jax import lax
from jax.experimental import pallas as pl
from jax.experimental.pallas import tpu as pltpu

INPUT_LEN = 13    # BayesReNet default input_length
HIDDEN = 50       # BayesLinear(input_length, 50)
OUTPUT_LEN = 1    # output_length
SCALE = 1.0       # BayesGaussian(..., scale=1) -> observation noise variance = scale**2
TILE_B = 2048     # batch tile on the lane axis (amortizes ~0.35us per-grid-step overhead)
_EPS = 1e-8
_LOG_2PI = math.log(2.0 * math.pi)


def _round_up(n, m):
    return ((n + m - 1) // m) * m


def _erf(x):
    # Abramowitz & Stegun 7.1.26 rational approximation (max abs err ~1.5e-7), built from
    # exp / abs / mul / add. The divide is seeded on the EUP (approx reciprocal) and
    # refined with one Newton step, so the exact-division VALU sequence disappears.
    # TODO(synk): torch.erf is exact to float precision; this is a ~1.5e-7-accurate polynomial.
    a1, a2, a3, a4, a5 = 0.254829592, -0.284496736, 1.421413741, -1.453152027, 1.061405429
    p = 0.3275911
    sign = jnp.where(x >= 0.0, 1.0, -1.0)
    ax = jnp.abs(x)
    d = 1.0 + p * ax
    t = pl.reciprocal(d, approx=True)
    t = t * (2.0 - d * t)                       # one Newton step -> ~f32-exact 1/d
    poly = ((((a5 * t + a4) * t + a3) * t + a2) * t + a1) * t
    y = 1.0 - poly * jnp.exp(-ax * ax)
    return sign * y


def bayes_renet_forward(x, targets, params, *, tile_b=TILE_B):
    """Mirrors BayesReNet.forward(inputs, targets, mode='analytic', reduction='sum')."""
    theta_w, theta_b, wg, bg = params

    B = x.shape[0]
    x2 = x.reshape(B, -1).astype(jnp.float32)          # inputs.view(B, -1)  -> (B, Din)
    t2 = targets.reshape(B, -1).astype(jnp.float32)    # (B, Dout)
    d_in = x2.shape[1]
    d_out = t2.shape[1]
    hid = theta_w.shape[1]

    dp = _round_up(d_in, 8)                            # sublane-aligned padded feature dims
    hp = _round_up(hid, 8)

    # ---- grid-invariant weight transforms, hoisted out of the kernel -------------------
    w_mean = jnp.tanh(theta_w)                         # (Din, H)  E[w] of binary weights
    w_var = 1.0 - w_mean * w_mean                      # Var[w]
    b_mean = jnp.tanh(theta_b).reshape(-1)             # (H,)
    b_var = 1.0 - b_mean * b_mean

    # Layer 1 (batch on lanes): m1 = W1m @ x + b1m ; v1 = W1v @ x^2 + b1v
    w1m = jnp.zeros((hp, dp), jnp.float32).at[:hid, :d_in].set(w_mean.T)
    w1v = jnp.zeros((hp, dp), jnp.float32).at[:hid, :d_in].set(w_var.T)
    b1m = jnp.zeros((hp, 1), jnp.float32).at[:hid, 0].set(b_mean)
    b1v = jnp.zeros((hp, 1), jnp.float32).at[:hid, 0].set(b_var)

    # Readout: m2 = W2m @ s_mean + b2m ; v2 = W2v @ s_var + scale^2
    w2m = jnp.zeros((d_out, hp), jnp.float32).at[:, :hid].set(wg.T)
    w2v = jnp.zeros((d_out, hp), jnp.float32).at[:, :hid].set((wg * wg).T)
    b2m = bg.reshape(d_out, 1).astype(jnp.float32)
    obs_var = SCALE * SCALE                            # scalar constant folded into kernel

    # ---- batch-on-lanes inputs, zero-padded to a whole number of lane-dense tiles ------
    # Cap tile at ~half the batch (rounded to 128) so num_tiles >= 2 whenever possible
    # (keeps both v7x TensorCores busy); TILE_B wins for large batches.
    tile = min(tile_b, max(128, _round_up((B + 1) // 2, 128)))
    num_tiles = (B + tile - 1) // tile
    b_pad = num_tiles * tile
    x_t = jnp.zeros((dp, b_pad), jnp.float32).at[:d_in, :B].set(x2.T)
    t_t = jnp.zeros((d_out, b_pad), jnp.float32).at[:, :B].set(t2.T)

    def kernel(x_ref, t_ref, w1m_ref, w1v_ref, b1m_ref, b1v_ref,
               w2m_ref, w2v_ref, b2m_ref, out_ref, nllp_ref):
        # ---- layers['full'] : BayesLinear (binary weights, dirac inputs, analytic) -----
        xb = x_ref[...]                                                    # (dp, TILE)
        m1 = jnp.dot(w1m_ref[...], xb,
                     preferred_element_type=jnp.float32) + b1m_ref[...]    # (hp, TILE)
        v1 = jnp.dot(w1v_ref[...], xb * xb,
                     preferred_element_type=jnp.float32) + b1v_ref[...]

        # ---- layers['sign'] : BayesSign (analytic) -------------------------------------
        s_mean = _erf(m1 * lax.rsqrt(2.0 * (v1 + _EPS)))
        s_var = 1.0 - s_mean * s_mean

        # ---- layers['gauss'] : BayesGaussian readout + Gaussian NLL --------------------
        m2 = jnp.dot(w2m_ref[...], s_mean,
                     preferred_element_type=jnp.float32) + b2m_ref[...]    # (d_out, TILE)
        v2 = jnp.dot(w2v_ref[...], s_var,
                     preferred_element_type=jnp.float32) + obs_var

        out_ref[...] = m2                                                  # lane-dense store

        diff = t_ref[...] - m2
        inv_v2 = pl.reciprocal(v2, approx=True)                            # EUP slot
        inv_v2 = inv_v2 * (2.0 - v2 * inv_v2)                              # Newton refine
        nll = 0.5 * (diff * diff * inv_v2 + jnp.log(v2) + _LOG_2PI)

        # Mask padded batch columns, then reduce this tile's NLL to a single partial (XLU).
        col = lax.broadcasted_iota(jnp.int32, nll.shape, 1) + pl.program_id(0) * tile
        nll = jnp.where(col < B, nll, 0.0)
        part = jnp.sum(nll, axis=1, keepdims=True)                         # (d_out, 1)
        part = jnp.sum(part, axis=0, keepdims=True)                        # (1, 1)
        nllp_ref[...] = jnp.broadcast_to(part, (8, 128))                   # aligned tile write

    out_shape = (jax.ShapeDtypeStruct((d_out, b_pad), jnp.float32),        # outputs (transposed)
                 jax.ShapeDtypeStruct((num_tiles * 8, 128), jnp.float32))  # per-tile NLL partials

    out_t, nll_part = pl.pallas_call(
        kernel,
        out_shape=out_shape,
        grid=(num_tiles,),
        in_specs=[
            pl.BlockSpec((dp, tile), lambda i: (0, i)),            # x tile (batch on lanes)
            pl.BlockSpec((d_out, tile), lambda i: (0, i)),         # targets tile (real row only)
            pl.BlockSpec((hp, dp), lambda i: (0, 0)),              # weights: constant index map
            pl.BlockSpec((hp, dp), lambda i: (0, 0)),              #   -> stay VMEM-resident
            pl.BlockSpec((hp, 1), lambda i: (0, 0)),
            pl.BlockSpec((hp, 1), lambda i: (0, 0)),
            pl.BlockSpec((d_out, hp), lambda i: (0, 0)),
            pl.BlockSpec((d_out, hp), lambda i: (0, 0)),
            pl.BlockSpec((d_out, 1), lambda i: (0, 0)),
        ],
        out_specs=(
            pl.BlockSpec((d_out, tile), lambda i: (0, i)),
            pl.BlockSpec((8, 128), lambda i: (i, 0)),              # per-tile partial (no sharing)
        ),
        compiler_params=pltpu.CompilerParams(
            dimension_semantics=("parallel",)),                    # batch tiles are independent
    )(x_t, t_t, w1m, w1v, b1m, b1v, w2m, w2v, b2m)

    outputs = out_t[:, :B].T                                       # (B, Dout)
    nll = jnp.sum(nll_part[::8, 0]).reshape([1])                   # reduction='sum'
    return outputs, nll


def init_params(key):
    k1, k2, k3 = jax.random.split(key, 3)
    theta_w = 0.1 * jax.random.normal(k1, (INPUT_LEN, HIDDEN), jnp.float32)   # binary-weight logits
    theta_b = 0.1 * jax.random.normal(k2, (1, HIDDEN), jnp.float32)           # binary-bias logits
    wg = jax.random.normal(k3, (HIDDEN, OUTPUT_LEN), jnp.float32) / math.sqrt(HIDDEN)
    bg = jnp.zeros((1, OUTPUT_LEN), jnp.float32)
    return theta_w, theta_b, wg, bg


if __name__ == "__main__":
    key = jax.random.PRNGKey(0)
    kp, kx, kt = jax.random.split(key, 3)
    params = init_params(kp)

    B = 8
    x = jax.random.normal(kx, (B, INPUT_LEN), jnp.float32)        # inputs (flattened to [B, 13])
    targets = jax.random.normal(kt, (B, OUTPUT_LEN), jnp.float32)

    outputs, nll = bayes_renet_forward(x, targets, params)
    outputs = jax.block_until_ready(outputs)
    nll = jax.block_until_ready(nll)

    assert outputs.shape == (B, OUTPUT_LEN)
    assert nll.shape == (1,)
    assert bool(jnp.all(jnp.isfinite(outputs))) and bool(jnp.isfinite(nll[0]))
    print("KERNEL_OK")
</pallas_src>

<mosaic_0001>
module attributes {stable_mosaic.version = 11 : i64} {
  func.func @kernel(%arg0: i32, %arg1: memref<16x128xf32, #tpu.memory_space<vmem>>, %arg2: memref<1x128xf32, #tpu.memory_space<vmem>>, %arg3: memref<56x16xf32, #tpu.memory_space<vmem>>, %arg4: memref<56x16xf32, #tpu.memory_space<vmem>>, %arg5: memref<56x1xf32, #tpu.memory_space<vmem>>, %arg6: memref<56x1xf32, #tpu.memory_space<vmem>>, %arg7: memref<1x56xf32, #tpu.memory_space<vmem>>, %arg8: memref<1x56xf32, #tpu.memory_space<vmem>>, %arg9: memref<1x1xf32, #tpu.memory_space<vmem>>, %arg10: memref<1x128xf32, #tpu.memory_space<vmem>>, %arg11: memref<8x128xf32, #tpu.memory_space<vmem>>) attributes {dimension_semantics = [#tpu.dimension_semantics<parallel>], iteration_bounds = array<i64: 1>, scalar_prefetch = 0 : i64, scratch_operands = 0 : i64, tpu.core_type = #tpu.core_type<tc>, window_params = [{transform_indices = @transform_0, window_bounds = array<i64: 16, 128>}, {transform_indices = @transform_1, window_bounds = array<i64: 1, 128>}, {pipeline_mode = #tpu.pipeline_mode<synchronous>, transform_indices = @transform_2, window_bounds = array<i64: 56, 16>}, {pipeline_mode = #tpu.pipeline_mode<synchronous>, transform_indices = @transform_3, window_bounds = array<i64: 56, 16>}, {pipeline_mode = #tpu.pipeline_mode<synchronous>, transform_indices = @transform_4, window_bounds = array<i64: 56, 1>}, {pipeline_mode = #tpu.pipeline_mode<synchronous>, transform_indices = @transform_5, window_bounds = array<i64: 56, 1>}, {pipeline_mode = #tpu.pipeline_mode<synchronous>, transform_indices = @transform_6, window_bounds = array<i64: 1, 56>}, {pipeline_mode = #tpu.pipeline_mode<synchronous>, transform_indices = @transform_7, window_bounds = array<i64: 1, 56>}, {pipeline_mode = #tpu.pipeline_mode<synchronous>, transform_indices = @transform_8, window_bounds = array<i64: 1, 1>}, {transform_indices = @transform_9, window_bounds = array<i64: 1, 128>}, {transform_indices = @transform_10, window_bounds = array<i64: 8, 128>}]} {
    %c0 = arith.constant 0 : index
    %c0_0 = arith.constant 0 : index
    %0 = vector.load %arg1[%c0, %c0_0] : memref<16x128xf32, #tpu.memory_space<vmem>>, vector<16x128xf32>
    %c0_1 = arith.constant 0 : index
    %c0_2 = arith.constant 0 : index
    %1 = vector.load %arg3[%c0_1, %c0_2] : memref<56x16xf32, #tpu.memory_space<vmem>>, vector<56x16xf32>
    %cst = arith.constant dense<0.000000e+00> : vector<56x128xf32>
    %2 = tpu.matmul %1, %0, %cst {dimension_numbers = #tpu.dot_dimension_numbers<[1], [0], [0], [1], [0, 0, 1, 1], [], []>} : vector<56x16xf32>, vector<16x128xf32>, vector<56x128xf32> -> vector<56x128xf32>
    %c0_3 = arith.constant 0 : index
    %c0_4 = arith.constant 0 : index
    %3 = vector.load %arg5[%c0_3, %c0_4] : memref<56x1xf32, #tpu.memory_space<vmem>>, vector<56x1xf32>
    %4 = vector.broadcast %3 : vector<56x1xf32> to vector<56x128xf32>
    %5 = arith.addf %2, %4 : vector<56x128xf32>
    %c0_5 = arith.constant 0 : index
    %c0_6 = arith.constant 0 : index
    %6 = vector.load %arg4[%c0_5, %c0_6] : memref<56x16xf32, #tpu.memory_space<vmem>>, vector<56x16xf32>
    %7 = arith.mulf %0, %0 : vector<16x128xf32>
    %cst_7 = arith.constant dense<0.000000e+00> : vector<56x128xf32>
    %8 = tpu.matmul %6, %7, %cst_7 {dimension_numbers = #tpu.dot_dimension_numbers<[1], [0], [0], [1], [0, 0, 1, 1], [], []>} : vector<56x16xf32>, vector<16x128xf32>, vector<56x128xf32> -> vector<56x128xf32>
    %c0_8 = arith.constant 0 : index
    %c0_9 = arith.constant 0 : index
    %9 = vector.load %arg6[%c0_8, %c0_9] : memref<56x1xf32, #tpu.memory_space<vmem>>, vector<56x1xf32>
    %10 = vector.broadcast %9 : vector<56x1xf32> to vector<56x128xf32>
    %11 = arith.addf %8, %10 : vector<56x128xf32>
    %cst_10 = arith.constant 9.99999993E-9 : f32
    %12 = vector.broadcast %cst_10 : f32 to vector<56x128xf32>
    %13 = arith.addf %11, %12 : vector<56x128xf32>
    %cst_11 = arith.constant 2.000000e+00 : f32
    %14 = vector.broadcast %cst_11 : f32 to vector<56x128xf32>
    %15 = arith.mulf %14, %13 : vector<56x128xf32>
    %16 = math.rsqrt %15 : vector<56x128xf32>
    %17 = arith.mulf %5, %16 : vector<56x128xf32>
    %cst_12 = arith.constant 0.000000e+00 : f32
    %18 = vector.broadcast %cst_12 : f32 to vector<56x128xf32>
    %19 = arith.cmpf oge, %17, %18 : vector<56x128xf32>
    %cst_13 = arith.constant 1.000000e+00 : f32
    %cst_14 = arith.constant -1.000000e+00 : f32
    %20 = vector.broadcast %cst_13 : f32 to vector<56x128xf32>
    %21 = vector.broadcast %cst_14 : f32 to vector<56x128xf32>
    %22 = arith.select %19, %20, %21 : vector<56x128xi1>, vector<56x128xf32>
    %23 = math.absf %17 : vector<56x128xf32>
    %cst_15 = arith.constant 0.327591091 : f32
    %24 = vector.broadcast %cst_15 : f32 to vector<56x128xf32>
    %25 = arith.mulf %24, %23 : vector<56x128xf32>
    %cst_16 = arith.constant 1.000000e+00 : f32
    %26 = vector.broadcast %cst_16 : f32 to vector<56x128xf32>
    %27 = arith.addf %26, %25 : vector<56x128xf32>
    %28 = tpu.reciprocal %27 {approx = true} : vector<56x128xf32> -> vector<56x128xf32>
    %29 = arith.mulf %27, %28 : vector<56x128xf32>
    %cst_17 = arith.constant 2.000000e+00 : f32
    %30 = vector.broadcast %cst_17 : f32 to vector<56x128xf32>
    %31 = arith.subf %30, %29 : vector<56x128xf32>
    %32 = arith.mulf %28, %31 : vector<56x128xf32>
    %cst_18 = arith.constant 1.06140542 : f32
    %33 = vector.broadcast %cst_18 : f32 to vector<56x128xf32>
    %34 = arith.mulf %33, %32 : vector<56x128xf32>
    %cst_19 = arith.constant -1.45315206 : f32
    %35 = vector.broadcast %cst_19 : f32 to vector<56x128xf32>
    %36 = arith.addf %34, %35 : vector<56x128xf32>
    %37 = arith.mulf %36, %32 : vector<56x128xf32>
    %cst_20 = arith.constant 1.42141378 : f32
    %38 = vector.broadcast %cst_20 : f32 to vector<56x128xf32>
    %39 = arith.addf %37, %38 : vector<56x128xf32>
    %40 = arith.mulf %39, %32 : vector<56x128xf32>
    %cst_21 = arith.constant -0.284496725 : f32
    %41 = vector.broadcast %cst_21 : f32 to vector<56x128xf32>
    %42 = arith.addf %40, %41 : vector<56x128xf32>
    %43 = arith.mulf %42, %32 : vector<56x128xf32>
    %cst_22 = arith.constant 0.254829586 : f32
    %44 = vector.broadcast %cst_22 : f32 to vector<56x128xf32>
    %45 = arith.addf %43, %44 : vector<56x128xf32>
    %46 = arith.mulf %45, %32 : vector<56x128xf32>
    %cst_23 = arith.constant 0.000000e+00 : f32
    %47 = vector.broadcast %cst_23 : f32 to vector<56x128xf32>
    %48 = arith.subf %47, %23 : vector<56x128xf32>
    %49 = arith.mulf %48, %23 : vector<56x128xf32>
    %50 = math.exp %49 : vector<56x128xf32>
    %51 = arith.mulf %46, %50 : vector<56x128xf32>
    %cst_24 = arith.constant 1.000000e+00 : f32
    %52 = vector.broadcast %cst_24 : f32 to vector<56x128xf32>
    %53 = arith.subf %52, %51 : vector<56x128xf32>
    %54 = arith.mulf %22, %53 : vector<56x128xf32>
    %55 = arith.mulf %54, %54 : vector<56x128xf32>
    %cst_25 = arith.constant 1.000000e+00 : f32
    %56 = vector.broadcast %cst_25 : f32 to vector<56x128xf32>
    %57 = arith.subf %56, %55 : vector<56x128xf32>
    %c0_26 = arith.constant 0 : index
    %c0_27 = arith.constant 0 : index
    %58 = vector.load %arg7[%c0_26, %c0_27] : memref<1x56xf32, #tpu.memory_space<vmem>>, vector<1x56xf32>
    %cst_28 = arith.constant dense<0.000000e+00> : vector<1x128xf32>
    %59 = tpu.matmul %58, %54, %cst_28 {dimension_numbers = #tpu.dot_dimension_numbers<[1], [0], [0], [1], [0, 0, 1, 1], [], []>} : vector<1x56xf32>, vector<56x128xf32>, vector<1x128xf32> -> vector<1x128xf32>
    %c0_29 = arith.constant 0 : index
    %c0_30 = arith.constant 0 : index
    %60 = vector.load %arg9[%c0_29, %c0_30] : memref<1x1xf32, #tpu.memory_space<vmem>>, vector<1x1xf32>
    %61 = vector.broadcast %60 : vector<1x1xf32> to vector<1x128xf32>
    %62 = arith.addf %59, %61 : vector<1x128xf32>
    %c0_31 = arith.constant 0 : index
    %c0_32 = arith.constant 0 : index
    %63 = vector.load %arg8[%c0_31, %c0_32] : memref<1x56xf32, #tpu.memory_space<vmem>>, vector<1x56xf32>
    %cst_33 = arith.constant dense<0.000000e+00> : vector<1x128xf32>
    %64 = tpu.matmul %63, %57, %cst_33 {dimension_numbers = #tpu.dot_dimension_numbers<[1], [0], [0], [1], [0, 0, 1, 1], [], []>} : vector<1x56xf32>, vector<56x128xf32>, vector<1x128xf32> -> vector<1x128xf32>
    %cst_34 = arith.constant 1.000000e+00 : f32
    %65 = vector.broadcast %cst_34 : f32 to vector<1x128xf32>
    %66 = arith.addf %64, %65 : vector<1x128xf32>
    %c0_35 = arith.constant 0 : index
    %c0_36 = arith.constant 0 : index
    %67 = vector.load %arg10[%c0_35, %c0_36] : memref<1x128xf32, #tpu.memory_space<vmem>>, vector<1x128xf32>
    tpu.vector_store %arg10[%c0_35, %c0_36], %62 {strides = array<i32>} : memref<1x128xf32, #tpu.memory_space<vmem>>, vector<1x128xf32>,
    %c0_37 = arith.constant 0 : index
    %c0_38 = arith.constant 0 : index
    %68 = vector.load %arg2[%c0_37, %c0_38] : memref<1x128xf32, #tpu.memory_space<vmem>>, vector<1x128xf32>
    %69 = arith.subf %68, %62 : vector<1x128xf32>
    %70 = tpu.reciprocal %66 {approx = true} : vector<1x128xf32> -> vector<1x128xf32>
    %71 = arith.mulf %66, %70 : vector<1x128xf32>
    %cst_39 = arith.constant 2.000000e+00 : f32
    %72 = vector.broadcast %cst_39 : f32 to vector<1x128xf32>
    %73 = arith.subf %72, %71 : vector<1x128xf32>
    %74 = arith.mulf %70, %73 : vector<1x128xf32>
    %75 = arith.mulf %69, %69 : vector<1x128xf32>
    %76 = arith.mulf %75, %74 : vector<1x128xf32>
    %77 = math.log %66 : vector<1x128xf32>
    %78 = arith.addf %76, %77 : vector<1x128xf32>
    %cst_40 = arith.constant 1.83787704 : f32
    %79 = vector.broadcast %cst_40 : f32 to vector<1x128xf32>
    %80 = arith.addf %78, %79 : vector<1x128xf32>
    %cst_41 = arith.constant 5.000000e-01 : f32
    %81 = vector.broadcast %cst_41 : f32 to vector<1x128xf32>
    %82 = arith.mulf %81, %80 : vector<1x128xf32>
    %83 = tpu.iota {dimensions = array<i32: 1>} : vector<1x128xi32>
    %c128_i32 = arith.constant 128 : i32
    %84 = arith.muli %arg0, %c128_i32 : i32
    %85 = vector.broadcast %84 : i32 to vector<1x128xi32>
    %86 = arith.addi %83, %85 : vector<1x128xi32>
    %c8_i32 = arith.constant 8 : i32
    %87 = vector.broadcast %c8_i32 : i32 to vector<1x128xi32>
    %88 = arith.cmpi slt, %86, %87 : vector<1x128xi32>
    %cst_42 = arith.constant 0.000000e+00 : f32
    %89 = vector.broadcast %cst_42 : f32 to vector<1x128xf32>
    %90 = arith.select %88, %82, %89 : vector<1x128xi1>, vector<1x128xf32>
    %cst_43 = arith.constant dense<0.000000e+00> : vector<1xf32>
    %91 = vector.multi_reduction <add>, %90, %cst_43 [1] : vector<1x128xf32> to vector<1xf32>
    %92 = vector.shape_cast %91 : vector<1xf32> to vector<1x1xf32>
    %cst_44 = arith.constant dense<0.000000e+00> : vector<1xf32>
    %93 = vector.multi_reduction <add>, %92, %cst_44 [0] : vector<1x1xf32> to vector<1xf32>
    %94 = vector.shape_cast %93 : vector<1xf32> to vector<1x1xf32>
    %95 = vector.shape_cast %94 : vector<1x1xf32> to vector<1x1xf32>
    %96 = vector.broadcast %95 : vector<1x1xf32> to vector<8x128xf32>
    %c0_45 = arith.constant 0 : index
    %c0_46 = arith.constant 0 : index
    %97 = vector.load %arg11[%c0_45, %c0_46] : memref<8x128xf32, #tpu.memory_space<vmem>>, vector<8x128xf32>
    tpu.vector_store %arg11[%c0_45, %c0_46], %96 {strides = array<i32>} : memref<8x128xf32, #tpu.memory_space<vmem>>, vector<8x128xf32>,
    return
  }
  func.func @transform_0(%arg0: i32) -> (i32, i32) {
    %c0_i32 = arith.constant 0 : i32
    %c0_i32_0 = arith.constant 0 : i32
    return %c0_i32, %arg0 : i32, i32
  }
  func.func @transform_1(%arg0: i32) -> (i32, i32) {
    %c0_i32 = arith.constant 0 : i32
    %c0_i32_0 = arith.constant 0 : i32
    return %c0_i32, %arg0 : i32, i32
  }
  func.func @transform_2(%arg0: i32) -> (i32, i32) {
    %c0_i32 = arith.constant 0 : i32
    %c0_i32_0 = arith.constant 0 : i32
    %c0_i32_1 = arith.constant 0 : i32
    return %c0_i32, %c0_i32_0 : i32, i32
  }
  func.func @transform_3(%arg0: i32) -> (i32, i32) {
    %c0_i32 = arith.constant 0 : i32
    %c0_i32_0 = arith.constant 0 : i32
    %c0_i32_1 = arith.constant 0 : i32
    return %c0_i32, %c0_i32_0 : i32, i32
  }
  func.func @transform_4(%arg0: i32) -> (i32, i32) {
    %c0_i32 = arith.constant 0 : i32
    %c0_i32_0 = arith.constant 0 : i32
    %c0_i32_1 = arith.constant 0 : i32
    return %c0_i32, %c0_i32_0 : i32, i32
  }
  func.func @transform_5(%arg0: i32) -> (i32, i32) {
    %c0_i32 = arith.constant 0 : i32
    %c0_i32_0 = arith.constant 0 : i32
    %c0_i32_1 = arith.constant 0 : i32
    return %c0_i32, %c0_i32_0 : i32, i32
  }
  func.func @transform_6(%arg0: i32) -> (i32, i32) {
    %c0_i32 = arith.constant 0 : i32
    %c0_i32_0 = arith.constant 0 : i32
    %c0_i32_1 = arith.constant 0 : i32
    return %c0_i32, %c0_i32_0 : i32, i32
  }
  func.func @transform_7(%arg0: i32) -> (i32, i32) {
    %c0_i32 = arith.constant 0 : i32
    %c0_i32_0 = arith.constant 0 : i32
    %c0_i32_1 = arith.constant 0 : i32
    return %c0_i32, %c0_i32_0 : i32, i32
  }
  func.func @transform_8(%arg0: i32) -> (i32, i32) {
    %c0_i32 = arith.constant 0 : i32
    %c0_i32_0 = arith.constant 0 : i32
    %c0_i32_1 = arith.constant 0 : i32
    return %c0_i32, %c0_i32_0 : i32, i32
  }
  func.func @transform_9(%arg0: i32) -> (i32, i32) {
    %c0_i32 = arith.constant 0 : i32
    %c0_i32_0 = arith.constant 0 : i32
    return %c0_i32, %arg0 : i32, i32
  }
  func.func @transform_10(%arg0: i32) -> (i32, i32) {
    %c0_i32 = arith.constant 0 : i32
    %c0_i32_0 = arith.constant 0 : i32
    return %arg0, %c0_i32 : i32, i32
  }
}

</mosaic_0001>

<llo_original>
// kernel: tpu_custom_call.1
$region0: #{tpu_custom_call.1}
  #allocation0 [shape = 'u32[]', space=smem, size = 0x4, offset = 0x4, fixed_abs, tag = 'smem constant byte address 0x4 - core index']
  #allocation1 [shape = 'u32[144,128]{1,0:T(1,128)}', space=vmem, size = 0x12000, scoped, tag = 'internal scratch']
  #allocation2 [shape = 'f32[1,1]{1,0:T(1,128)S(1)}', space=vmem, size = 0x200, scoped, tag = 'scoped memory for tpu_custom_call.1']
  %s0 = inlined_call_operand.vmem [shape: f32[16,128], index: 0, kind: input, shape index: {}]
  %s1 = inlined_call_operand.vmem [shape: f32[1,128], index: 1, kind: input, shape index: {}]
  %s2 = inlined_call_operand.vmem [shape: f32[56,16], index: 2, kind: input, shape index: {}]
  %s3 = inlined_call_operand.vmem [shape: f32[56,16], index: 3, kind: input, shape index: {}]
  %s4 = inlined_call_operand.vmem [shape: f32[56,1], index: 4, kind: input, shape index: {}]
  %s5 = inlined_call_operand.vmem [shape: f32[56,1], index: 5, kind: input, shape index: {}]
  %s6 = inlined_call_operand.vmem [shape: f32[1,56], index: 6, kind: input, shape index: {}]
  %s7 = inlined_call_operand.vmem [shape: f32[1,56], index: 7, kind: input, shape index: {}]
  %s8 = inlined_call_operand.<no memory space> [shape: f32[1,1], index: 8, kind: input, shape index: {}]
  %s9 = inlined_call_operand.hbm [shape: f32[1,128], index: 9, kind: output, shape index: {0}]
  %s10 = inlined_call_operand.hbm [shape: f32[8,128], index: 10, kind: output, shape index: {1}]
  %11 = xla_tuple %s9, %s10
  %s12 = sld [smem:[#allocation0]]
  $region54: #{tpu_custom_call.1} parent=0
    _
  %s14 = ssub.s32 1, %s12
  %s15 = scalar_select 0, %s14, %s12
  %v16 = vstv %s8
  %17 = vst [vmem:[#allocation2] sm:$0x1] %v16
  $region1: #{tpu_custom_call.1} parent=0
    #allocation3 [shape = 'u8[512]{0}', space=vmem, size = 0x400, scoped, tag = 'output window, operand 0, single buffered']
    #allocation4 [shape = 's32[1]{0}', space=sflag, size = 0x4, scoped, tag = 'scoped memory for tpu_custom_call.1']
    #allocation5 [shape = 'u8[4096]{0}', space=vmem, size = 0x1000, scoped, tag = 'output window, operand 1, single buffered']
    #allocation6 [shape = 's32[1]{0}', space=sflag, size = 0x4, scoped, tag = 'scoped memory for tpu_custom_call.1']
    %18 = vsyncpa [#allocation4], 0
    %19 = vsyncpa [#allocation6], 0
    // Predicated region
    $region2: #{tpu_custom_call.1} parent=1 // pred_check
      _
    $region3: #{tpu_custom_call.1} parent=1 // pred_check_branch
      %21 = sbr.rel (0) target = $region5
    $region4: #{tpu_custom_call.1} parent=1 // pred_region
      _
    $region5: #{tpu_custom_call.1} parent=1 // pred_fallthru
      _
    // Predicated region
    $region6: #{tpu_custom_call.1} parent=1 // pred_check
      _
    $region7: #{tpu_custom_call.1} parent=1 // pred_check_branch
      %23 = sbr.rel (0) target = $region9
    $region8: #{tpu_custom_call.1} parent=1 // pred_region
      _
    $region9: #{tpu_custom_call.1} parent=1 // pred_fallthru
      _
    // Predicated region
    $region10: #{tpu_custom_call.1} parent=1 // pred_check
      _
    $region11: #{tpu_custom_call.1} parent=1 // pred_check_branch
      %25 = sbr.rel (0) target = $region13
    $region12: #{tpu_custom_call.1} parent=1 // pred_region
      _
    $region13: #{tpu_custom_call.1} parent=1 // pred_fallthru
      _
    // Predicated region
    $region14: #{tpu_custom_call.1} parent=1 // pred_check
      _
    $region15: #{tpu_custom_call.1} parent=1 // pred_check_branch
      %27 = sbr.rel (0) target = $region17
    $region16: #{tpu_custom_call.1} parent=1 // pred_region
      _
    $region17: #{tpu_custom_call.1} parent=1 // pred_fallthru
      _
    // Predicated region
    $region18: #{tpu_custom_call.1} parent=1 // pred_check
      _
    $region19: #{tpu_custom_call.1} parent=1 // pred_check_branch
      %29 = sbr.rel (0) target = $region21
    $region20: #{tpu_custom_call.1} parent=1 // pred_region
      _
    $region21: #{tpu_custom_call.1} parent=1 // pred_fallthru
      _
    // Predicated region
    $region22: #{tpu_custom_call.1} parent=1 // pred_check
      _
    $region23: #{tpu_custom_call.1} parent=1 // pred_check_branch
      %31 = sbr.rel (0) target = $region25
    $region24: #{tpu_custom_call.1} parent=1 // pred_region
      _
    $region25: #{tpu_custom_call.1} parent=1 // pred_fallthru
      _
    // Predicated region
    $region26: #{tpu_custom_call.1} parent=1 // pred_check
      _
    $region27: #{tpu_custom_call.1} parent=1 // pred_check_branch
      %33 = sbr.rel (0) target = $region29
    $region28: #{tpu_custom_call.1} parent=1 // pred_region
      _
    $region29: #{tpu_custom_call.1} parent=1 // pred_fallthru
      _
    // Predicated region
    $region30: #{tpu_custom_call.1} parent=1 // pred_check
      _
    $region31: #{tpu_custom_call.1} parent=1 // pred_check_branch
      %35 = sbr.rel (0) target = $region33
    $region32: #{tpu_custom_call.1} parent=1 // pred_region
      _
    $region33: #{tpu_custom_call.1} parent=1 // pred_fallthru
      _
    // Predicated region
    $region34: #{tpu_custom_call.1} parent=1 // pred_check
      _
    $region35: #{tpu_custom_call.1} parent=1 // pred_check_branch
      %37 = sbr.rel (0) target = $region37
    $region36: #{tpu_custom_call.1} parent=1 // pred_region
      _
    $region37: #{tpu_custom_call.1} parent=1 // pred_fallthru
      _
    %v38 = vld [vmem:[%s0] sm:$0xff]
    %v39 = vld [vmem:[%s0 + $0x8] sm:$0xff]
    %v40 = vld [vmem:[%s2] sm:$0xff]
    %v41 = vld [vmem:[%s2 + $0x8] sm:$0xff]
    %v42 = vld [vmem:[%s2 + $0x10] sm:$0xff]
    %v43 = vld [vmem:[%s2 + $0x18] sm:$0xff]
    %v44 = vld [vmem:[%s2 + $0x20] sm:$0xff]
    %v45 = vld [vmem:[%s2 + $0x28] sm:$0xff]
    %v46 = vld [vmem:[%s2 + $0x30] sm:$0xff]
    %v47 = vld [vmem:[%s4] sm:$0xff]
    %v48 = vld [vmem:[%s4 + $0x8] sm:$0xff]
    %v49 = vld [vmem:[%s4 + $0x10] sm:$0xff]
    %v50 = vld [vmem:[%s4 + $0x18] sm:$0xff]
    %v51 = vld [vmem:[%s4 + $0x20] sm:$0xff]
    %v52 = vld [vmem:[%s4 + $0x28] sm:$0xff]
    %v53 = vld [vmem:[%s4 + $0x30] sm:$0xff]
    %55 = vset.pattern.permute.xlu0 0
    %56 = vperm.xlu0 %55, %v47
    %v57 = vpop.permute.xlu0 %56
    %60 = vset.pattern.permute.xlu0 0
    %61 = vperm.xlu0 %60, %v48
    %v62 = vpop.permute.xlu0 %61
    %65 = vset.pattern.permute.xlu0 0
    %66 = vperm.xlu0 %65, %v49
    %v67 = vpop.permute.xlu0 %66
    %70 = vset.pattern.permute.xlu0 0
    %71 = vperm.xlu0 %70, %v50
    %v72 = vpop.permute.xlu0 %71
    %75 = vset.pattern.permute.xlu0 0
    %76 = vperm.xlu0 %75, %v51
    %v77 = vpop.permute.xlu0 %76
    %80 = vset.pattern.permute.xlu0 0
    %81 = vperm.xlu0 %80, %v52
    %v82 = vpop.permute.xlu0 %81
    %85 = vset.pattern.permute.xlu0 0
    %86 = vperm.xlu0 %85, %v53
    %v87 = vpop.permute.xlu0 %86
    %vm89 = vcmask 130048
    %v91 = vsel %vm89, %v40, 0
    %v94 = vsel %vm89, %v41, 0
    %v97 = vsel %vm89, %v42, 0
    %v100 = vsel %vm89, %v43, 0
    %v103 = vsel %vm89, %v44, 0
    %v106 = vsel %vm89, %v45, 0
    %v109 = vsel %vm89, %v46, 0
    %111 = vmatprep.subr.mxu0 0.0
    %112 = vmatpush1.msra.mxu0 %v38
    %113 = vmatprep.subr.mxu0 0.0
    %114 = vmatpush1.msra.mxu0 %v39
    %115 = vmatprep.subr.mxu0 0.0
    %116 = vmatpush1.msra.mxu0 0.0
    %117 = vmatprep.subr.mxu0 0.0
    %118 = vmatpush1.msra.mxu0 0.0
    %119 = vmatprep.subr.mxu0 0.0
    %120 = vmatpush1.msra.mxu0 0.0
    %121 = vmatprep.subr.mxu0 0.0
    %122 = vmatpush1.msra.mxu0 0.0
    %123 = vmatprep.subr.mxu0 0.0
    %124 = vmatpush1.msra.mxu0 0.0
    %125 = vmatprep.subr.mxu0 0.0
    %126 = vmatpush1.msra.mxu0 0.0
    %127 = vmatprep.subr.mxu0 0.0
    %128 = vmatpush1.msra.mxu0 0.0
    %129 = vmatprep.subr.mxu0 0.0
    %130 = vmatpush1.msra.mxu0 0.0
    %131 = vmatprep.subr.mxu0 0.0
    %132 = vmatpush1.msra.mxu0 0.0
    %133 = vmatprep.subr.mxu0 0.0
    %134 = vmatpush1.msra.mxu0 0.0
    %135 = vmatprep.subr.mxu0 0.0
    %136 = vmatpush1.msra.mxu0 0.0
    %137 = vmatprep.subr.mxu0 0.0
    %138 = vmatpush1.msra.mxu0 0.0
    %139 = vmatprep.subr.mxu0 0.0
    %140 = vmatpush1.msra.mxu0 0.0
    %141 = vmatprep.subr.mxu0 0.0
    %142 = vmatpush1.msra.mxu0 0.0
    %143 = vmatprep.subr.mxu0 0.0
    %144 = vmatpush1.msra.mxu0 0.0
    %145 = vmatprep.subr.mxu0 0.0
    %146 = vmatpush1.msra.mxu0 0.0
    %147 = vmatprep.subr.mxu0 0.0
    %148 = vmatpush1.msra.mxu0 0.0
    %149 = vmatprep.subr.mxu0 0.0
    %150 = vmatpush1.msra.mxu0 0.0
    %151 = vmatprep.subr.mxu0 0.0
    %152 = vmatpush1.msra.mxu0 0.0
    %153 = vmatprep.subr.mxu0 0.0
    %154 = vmatpush1.msra.mxu0 0.0
    %155 = vmatprep.subr.mxu0 0.0
    %156 = vmatpush1.msra.mxu0 0.0
    %157 = vmatprep.subr.mxu0 0.0
    %158 = vmatpush1.msra.mxu0 0.0
    %159 = vmatprep.subr.mxu0 0.0
    %160 = vmatpush1.msra.mxu0 0.0
    %161 = vmatprep.subr.mxu0 0.0
    %162 = vmatpush1.msra.mxu0 0.0
    %163 = vmatprep.subr.mxu0 0.0
    %164 = vmatpush1.msra.mxu0 0.0
    %165 = vmatprep.subr.mxu0 0.0
    %166 = vmatpush1.msra.mxu0 0.0
    %167 = vmatprep.subr.mxu0 0.0
    %168 = vmatpush1.msra.mxu0 0.0
    %169 = vmatprep.subr.mxu0 0.0
    %170 = vmatpush1.msra.mxu0 0.0
    %171 = vmatprep.subr.mxu0 0.0
    %172 = vmatpush1.msra.mxu0 0.0
    %173 = vmatprep.subr.mxu0 0.0
    %174 = vmatpush1.msra.mxu0 0.0
    %175 = vmatprep.mubr.f32.mxu0 0.0
    %176 = vmatmul.mubr.f32.gmra.mrb[0].mxu0 %v91
    %v177 = vpop.f32.mrb[0].mxu0
    %v178 = vadd.f32 %v57, %v177
    %v179 = vpop.f32.mrb[0].mxu0
    %180 = vmatprep.mubr.f32.mxu0 0.0
    %181 = vmatmul.mubr.f32.gmra.mrb[0].mxu0 %v94
    %v182 = vpop.f32.mrb[0].mxu0
    %v183 = vadd.f32 %v62, %v182
    %v184 = vpop.f32.mrb[0].mxu0
    %185 = vmatprep.mubr.f32.mxu0 0.0
    %186 = vmatmul.mubr.f32.gmra.mrb[0].mxu0 %v97
    %v187 = vpop.f32.mrb[0].mxu0
    %v188 = vadd.f32 %v67, %v187
    %v189 = vpop.f32.mrb[0].mxu0
    %190 = vmatprep.mubr.f32.mxu0 0.0
    %191 = vmatmul.mubr.f32.gmra.mrb[0].mxu0 %v100
    %v192 = vpop.f32.mrb[0].mxu0
    %v193 = vadd.f32 %v72, %v192
    %v194 = vpop.f32.mrb[0].mxu0
    %195 = vmatprep.mubr.f32.mxu0 0.0
    %196 = vmatmul.mubr.f32.gmra.mrb[0].mxu0 %v103
    %v197 = vpop.f32.mrb[0].mxu0
    %v198 = vadd.f32 %v77, %v197
    %v199 = vpop.f32.mrb[0].mxu0
    %200 = vmatprep.mubr.f32.mxu0 0.0
    %201 = vmatmul.mubr.f32.gmra.mrb[0].mxu0 %v106
    %v202 = vpop.f32.mrb[0].mxu0
    %v203 = vadd.f32 %v82, %v202
    %v204 = vpop.f32.mrb[0].mxu0
    %205 = vmatprep.mubr.f32.mxu0 0.0
    %206 = vmatmul.mubr.f32.gmra.mrb[0].mxu0 %v109
    %v207 = vpop.f32.mrb[0].mxu0
    %v208 = vadd.f32 %v87, %v207
    %v209 = vpop.f32.mrb[0].mxu0
    %210 = vdwg.mxu0
    %v211 = vld [vmem:[%s3] sm:$0xff]
    %v212 = vld [vmem:[%s3 + $0x8] sm:$0xff]
    %v213 = vld [vmem:[%s3 + $0x10] sm:$0xff]
    %v214 = vld [vmem:[%s3 + $0x18] sm:$0xff]
    %v215 = vld [vmem:[%s3 + $0x20] sm:$0xff]
    %v216 = vld [vmem:[%s3 + $0x28] sm:$0xff]
    %v217 = vld [vmem:[%s3 + $0x30] sm:$0xff]
    %v218 = vmul.f32 %v38, %v38
    %v219 = vmul.f32 %v39, %v39
    %v220 = vld [vmem:[%s5] sm:$0xff]
    %v221 = vld [vmem:[%s5 + $0x8] sm:$0xff]
    %v222 = vld [vmem:[%s5 + $0x10] sm:$0xff]
    %v223 = vld [vmem:[%s5 + $0x18] sm:$0xff]
    %v224 = vld [vmem:[%s5 + $0x20] sm:$0xff]
    %v225 = vld [vmem:[%s5 + $0x28] sm:$0xff]
    %v226 = vld [vmem:[%s5 + $0x30] sm:$0xff]
    %228 = vset.pattern.permute.xlu0 0
    %229 = vperm.xlu0 %228, %v220
    %v230 = vpop.permute.xlu0 %229
    %233 = vset.pattern.permute.xlu0 0
    %234 = vperm.xlu0 %233, %v221
    %v235 = vpop.permute.xlu0 %234
    %238 = vset.pattern.permute.xlu0 0
    %239 = vperm.xlu0 %238, %v222
    %v240 = vpop.permute.xlu0 %239
    %243 = vset.pattern.permute.xlu0 0
    %244 = vperm.xlu0 %243, %v223
    %v245 = vpop.permute.xlu0 %244
    %248 = vset.pattern.permute.xlu0 0
    %249 = vperm.xlu0 %248, %v224
    %v250 = vpop.permute.xlu0 %249
    %253 = vset.pattern.permute.xlu0 0
    %254 = vperm.xlu0 %253, %v225
    %v255 = vpop.permute.xlu0 %254
    %258 = vset.pattern.permute.xlu0 0
    %259 = vperm.xlu0 %258, %v226
    %v260 = vpop.permute.xlu0 %259
    %v263 = vsel %vm89, %v211, 0
    %v266 = vsel %vm89, %v212, 0
    %v269 = vsel %vm89, %v213, 0
    %v272 = vsel %vm89, %v214, 0
    %v275 = vsel %vm89, %v215, 0
    %v278 = vsel %vm89, %v216, 0
    %v281 = vsel %vm89, %v217, 0
    %283 = vmatprep.subr.mxu0 0.0
    %284 = vmatpush1.msra.mxu0 %v218
    %285 = vmatprep.subr.mxu0 0.0
    %286 = vmatpush1.msra.mxu0 %v219
    %287 = vmatprep.subr.mxu0 0.0
    %288 = vmatpush1.msra.mxu0 0.0
    %289 = vmatprep.subr.mxu0 0.0
    %290 = vmatpush1.msra.mxu0 0.0
    %291 = vmatprep.subr.mxu0 0.0
    %292 = vmatpush1.msra.mxu0 0.0
    %293 = vmatprep.subr.mxu0 0.0
    %294 = vmatpush1.msra.mxu0 0.0
    %295 = vmatprep.subr.mxu0 0.0
    %296 = vmatpush1.msra.mxu0 0.0
    %297 = vmatprep.subr.mxu0 0.0
    %298 = vmatpush1.msra.mxu0 0.0
    %299 = vmatprep.subr.mxu0 0.0
    %300 = vmatpush1.msra.mxu0 0.0
    %301 = vmatprep.subr.mxu0 0.0
    %302 = vmatpush1.msra.mxu0 0.0
    %303 = vmatprep.subr.mxu0 0.0
    %304 = vmatpush1.msra.mxu0 0.0
    %305 = vmatprep.subr.mxu0 0.0
    %306 = vmatpush1.msra.mxu0 0.0
    %307 = vmatprep.subr.mxu0 0.0
    %308 = vmatpush1.msra.mxu0 0.0
    %309 = vmatprep.subr.mxu0 0.0
    %310 = vmatpush1.msra.mxu0 0.0
    %311 = vmatprep.subr.mxu0 0.0
    %312 = vmatpush1.msra.mxu0 0.0
    %313 = vmatprep.subr.mxu0 0.0
    %314 = vmatpush1.msra.mxu0 0.0
    %315 = vmatprep.subr.mxu0 0.0
    %316 = vmatpush1.msra.mxu0 0.0
    %317 = vmatprep.subr.mxu0 0.0
    %318 = vmatpush1.msra.mxu0 0.0
    %319 = vmatprep.subr.mxu0 0.0
    %320 = vmatpush1.msra.mxu0 0.0
    %321 = vmatprep.subr.mxu0 0.0
    %322 = vmatpush1.msra.mxu0 0.0
    %323 = vmatprep.subr.mxu0 0.0
    %324 = vmatpush1.msra.mxu0 0.0
    %325 = vmatprep.subr.mxu0 0.0
    %326 = vmatpush1.msra.mxu0 0.0
    %327 = vmatprep.subr.mxu0 0.0
    %328 = vmatpush1.msra.mxu0 0.0
    %329 = vmatprep.subr.mxu0 0.0
    %330 = vmatpush1.msra.mxu0 0.0
    %331 = vmatprep.subr.mxu0 0.0
    %332 = vmatpush1.msra.mxu0 0.0
    %333 = vmatprep.subr.mxu0 0.0
    %334 = vmatpush1.msra.mxu0 0.0
    %335 = vmatprep.subr.mxu0 0.0
    %336 = vmatpush1.msra.mxu0 0.0
    %337 = vmatprep.subr.mxu0 0.0
    %338 = vmatpush1.msra.mxu0 0.0
    %339 = vmatprep.subr.mxu0 0.0
    %340 = vmatpush1.msra.mxu0 0.0
    %341 = vmatprep.subr.mxu0 0.0
    %342 = vmatpush1.msra.mxu0 0.0
    %343 = vmatprep.subr.mxu0 0.0
    %344 = vmatpush1.msra.mxu0 0.0
    %345 = vmatprep.subr.mxu0 0.0
    %346 = vmatpush1.msra.mxu0 0.0
    %347 = vmatprep.mubr.f32.mxu0 0.0
    %348 = vmatmul.mubr.f32.gmra.mrb[0].mxu0 %v263
    %v349 = vpop.f32.mrb[0].mxu0
    %v350 = vadd.f32 %v230, %v349
    %v351 = vpop.f32.mrb[0].mxu0
    %352 = vmatprep.mubr.f32.mxu0 0.0
    %353 = vmatmul.mubr.f32.gmra.mrb[0].mxu0 %v266
    %v354 = vpop.f32.mrb[0].mxu0
    %v355 = vadd.f32 %v235, %v354
    %v356 = vpop.f32.mrb[0].mxu0
    %357 = vmatprep.mubr.f32.mxu0 0.0
    %358 = vmatmul.mubr.f32.gmra.mrb[0].mxu0 %v269
    %v359 = vpop.f32.mrb[0].mxu0
    %v360 = vadd.f32 %v240, %v359
    %v361 = vpop.f32.mrb[0].mxu0
    %362 = vmatprep.mubr.f32.mxu0 0.0
    %363 = vmatmul.mubr.f32.gmra.mrb[0].mxu0 %v272
    %v364 = vpop.f32.mrb[0].mxu0
    %v365 = vadd.f32 %v245, %v364
    %v366 = vpop.f32.mrb[0].mxu0
    %367 = vmatprep.mubr.f32.mxu0 0.0
    %368 = vmatmul.mubr.f32.gmra.mrb[0].mxu0 %v275
    %v369 = vpop.f32.mrb[0].mxu0
    %v370 = vadd.f32 %v250, %v369
    %v371 = vpop.f32.mrb[0].mxu0
    %372 = vmatprep.mubr.f32.mxu0 0.0
    %373 = vmatmul.mubr.f32.gmra.mrb[0].mxu0 %v278
    %v374 = vpop.f32.mrb[0].mxu0
    %v375 = vadd.f32 %v255, %v374
    %v376 = vpop.f32.mrb[0].mxu0
    %377 = vmatprep.mubr.f32.mxu0 0.0
    %378 = vmatmul.mubr.f32.gmra.mrb[0].mxu0 %v281
    %v379 = vpop.f32.mrb[0].mxu0
    %v380 = vadd.f32 %v260, %v379
    %v381 = vpop.f32.mrb[0].mxu0
    %382 = vdwg.mxu0
    %v383 = vadd.f32 %v350, 1e-08
    %v384 = vadd.f32 %v355, 1e-08
    %v385 = vadd.f32 %v360, 1e-08
    %v386 = vadd.f32 %v365, 1e-08
    %v387 = vadd.f32 %v370, 1e-08
    %v388 = vadd.f32 %v375, 1e-08
    %v389 = vadd.f32 %v380, 1e-08
    %v390 = vmul.f32 %v383, 2.0
    %v391 = vmul.f32 %v384, 2.0
    %v392 = vmul.f32 %v385, 2.0
    %v393 = vmul.f32 %v386, 2.0
    %v394 = vmul.f32 %v387, 2.0
    %v395 = vmul.f32 %v388, 2.0
    %v396 = vmul.f32 %v389, 2.0
    %v397 = vrsqrt.pop %v390
    %v398 = vrsqrt.pop %v391
    %v399 = vrsqrt.pop %v392
    %v400 = vrsqrt.pop %v393
    %v401 = vrsqrt.pop %v394
    %v402 = vrsqrt.pop %v395
    %v403 = vrsqrt.pop %v396
    %v404 = vmul.f32 %v178, %v397
    %v405 = vmul.f32 %v183, %v398
    %v406 = vmul.f32 %v188, %v399
    %v407 = vmul.f32 %v193, %v400
    %v408 = vmul.f32 %v198, %v401
    %v409 = vmul.f32 %v203, %v402
    %v410 = vmul.f32 %v208, %v403
    %vm411 = vcmp.ge.f32.partialorder %v404, 0.0
    %vm412 = vcmp.ge.f32.partialorder %v405, 0.0
    %vm413 = vcmp.ge.f32.partialorder %v406, 0.0
    %vm414 = vcmp.ge.f32.partialorder %v407, 0.0
    %vm415 = vcmp.ge.f32.partialorder %v408, 0.0
    %vm416 = vcmp.ge.f32.partialorder %v409, 0.0
    %vm417 = vcmp.ge.f32.partialorder %v410, 0.0
    %v418 = vsel %vm411, 1.0, -1.0
    %v419 = vsel %vm412, 1.0, -1.0
    %v420 = vsel %vm413, 1.0, -1.0
    %v421 = vsel %vm414, 1.0, -1.0
    %v422 = vsel %vm415, 1.0, -1.0
    %v423 = vsel %vm416, 1.0, -1.0
    %v424 = vsel %vm417, 1.0, -1.0
    %v425 = vand.u32 2147483647, %v404
    %v426 = vand.u32 2147483647, %v405
    %v427 = vand.u32 2147483647, %v406
    %v428 = vand.u32 2147483647, %v407
    %v429 = vand.u32 2147483647, %v408
    %v430 = vand.u32 2147483647, %v409
    %v431 = vand.u32 2147483647, %v410
    %v432 = vmul.f32 %v425, 0.3275911
    %v433 = vmul.f32 %v426, 0.3275911
    %v434 = vmul.f32 %v427, 0.3275911
    %v435 = vmul.f32 %v428, 0.3275911
    %v436 = vmul.f32 %v429, 0.3275911
    %v437 = vmul.f32 %v430, 0.3275911
    %v438 = vmul.f32 %v431, 0.3275911
    %v439 = vadd.f32 %v432, 1.0
    %v440 = vadd.f32 %v433, 1.0
    %v441 = vadd.f32 %v434, 1.0
    %v442 = vadd.f32 %v435, 1.0
    %v443 = vadd.f32 %v436, 1.0
    %v444 = vadd.f32 %v437, 1.0
    %v445 = vadd.f32 %v438, 1.0
    %v446 = vrcp.pop %v439
    %v447 = vrcp.pop %v440
    %v448 = vrcp.pop %v441
    %v449 = vrcp.pop %v442
    %v450 = vrcp.pop %v443
    %v451 = vrcp.pop %v444
    %v452 = vrcp.pop %v445
    %v453 = vmul.f32 %v439, %v446
    %v454 = vmul.f32 %v440, %v447
    %v455 = vmul.f32 %v441, %v448
    %v456 = vmul.f32 %v442, %v449
    %v457 = vmul.f32 %v443, %v450
    %v458 = vmul.f32 %v444, %v451
    %v459 = vmul.f32 %v445, %v452
    %v460 = vsub.f32 2.0, %v453
    %v461 = vsub.f32 2.0, %v454
    %v462 = vsub.f32 2.0, %v455
    %v463 = vsub.f32 2.0, %v456
    %v464 = vsub.f32 2.0, %v457
    %v465 = vsub.f32 2.0, %v458
    %v466 = vsub.f32 2.0, %v459
    %v467 = vmul.f32 %v446, %v460
    %v468 = vmul.f32 %v447, %v461
    %v469 = vmul.f32 %v448, %v462
    %v470 = vmul.f32 %v449, %v463
    %v471 = vmul.f32 %v450, %v464
    %v472 = vmul.f32 %v451, %v465
    %v473 = vmul.f32 %v452, %v466
    %v474 = vmul.f32 %v467, 1.0614054
    %v475 = vmul.f32 %v468, 1.0614054
    %v476 = vmul.f32 %v469, 1.0614054
    %v477 = vmul.f32 %v470, 1.0614054
    %v478 = vmul.f32 %v471, 1.0614054
    %v479 = vmul.f32 %v472, 1.0614054
    %v480 = vmul.f32 %v473, 1.0614054
    %v481 = vadd.f32 %v474, -1.4531521
    %v482 = vadd.f32 %v475, -1.4531521
    %v483 = vadd.f32 %v476, -1.4531521
    %v484 = vadd.f32 %v477, -1.4531521
    %v485 = vadd.f32 %v478, -1.4531521
    %v486 = vadd.f32 %v479, -1.4531521
    %v487 = vadd.f32 %v480, -1.4531521
    %v488 = vmul.f32 %v481, %v467
    %v489 = vmul.f32 %v482, %v468
    %v490 = vmul.f32 %v483, %v469
    %v491 = vmul.f32 %v484, %v470
    %v492 = vmul.f32 %v485, %v471
    %v493 = vmul.f32 %v486, %v472
    %v494 = vmul.f32 %v487, %v473
    %v495 = vadd.f32 %v488, 1.4214138
    %v496 = vadd.f32 %v489, 1.4214138
    %v497 = vadd.f32 %v490, 1.4214138
    %v498 = vadd.f32 %v491, 1.4214138
    %v499 = vadd.f32 %v492, 1.4214138
    %v500 = vadd.f32 %v493, 1.4214138
    %v501 = vadd.f32 %v494, 1.4214138
    %v502 = vmul.f32 %v495, %v467
    %v503 = vmul.f32 %v496, %v468
    %v504 = vmul.f32 %v497, %v469
    %v505 = vmul.f32 %v498, %v470
    %v506 = vmul.f32 %v499, %v471
    %v507 = vmul.f32 %v500, %v472
    %v508 = vmul.f32 %v501, %v473
    %v509 = vadd.f32 %v502, -0.28449672
    %v510 = vadd.f32 %v503, -0.28449672
    %v511 = vadd.f32 %v504, -0.28449672
    %v512 = vadd.f32 %v505, -0.28449672
    %v513 = vadd.f32 %v506, -0.28449672
    %v514 = vadd.f32 %v507, -0.28449672
    %v515 = vadd.f32 %v508, -0.28449672
    %v516 = vmul.f32 %v509, %v467
    %v517 = vmul.f32 %v510, %v468
    %v518 = vmul.f32 %v511, %v469
    %v519 = vmul.f32 %v512, %v470
    %v520 = vmul.f32 %v513, %v471
    %v521 = vmul.f32 %v514, %v472
    %v522 = vmul.f32 %v515, %v473
    %v523 = vadd.f32 %v516, 0.2548296
    %v524 = vadd.f32 %v517, 0.2548296
    %v525 = vadd.f32 %v518, 0.2548296
    %v526 = vadd.f32 %v519, 0.2548296
    %v527 = vadd.f32 %v520, 0.2548296
    %v528 = vadd.f32 %v521, 0.2548296
    %v529 = vadd.f32 %v522, 0.2548296
    %v530 = vmul.f32 %v523, %v467
    %v531 = vmul.f32 %v524, %v468
    %v532 = vmul.f32 %v525, %v469
    %v533 = vmul.f32 %v526, %v470
    %v534 = vmul.f32 %v527, %v471
    %v535 = vmul.f32 %v528, %v472
    %v536 = vmul.f32 %v529, %v473
    %v537 = vsub.f32 0.0, %v425
    %v538 = vsub.f32 0.0, %v426
    %v539 = vsub.f32 0.0, %v427
    %v540 = vsub.f32 0.0, %v428
    %v541 = vsub.f32 0.0, %v429
    %v542 = vsub.f32 0.0, %v430
    %v543 = vsub.f32 0.0, %v431
    %v544 = vmul.f32 %v537, %v425
    %v545 = vmul.f32 %v538, %v426
    %v546 = vmul.f32 %v539, %v427
    %v547 = vmul.f32 %v540, %v428
    %v548 = vmul.f32 %v541, %v429
    %v549 = vmul.f32 %v542, %v430
    %v550 = vmul.f32 %v543, %v431
    %v551 = vmul.f32 %v544, 1.442695
    %v552 = vpow.pop %v551
    %v553 = vmul.f32 %v545, 1.442695
    %v554 = vpow.pop %v553
    %v555 = vmul.f32 %v546, 1.442695
    %v556 = vpow.pop %v555
    %v557 = vmul.f32 %v547, 1.442695
    %v558 = vpow.pop %v557
    %v559 = vmul.f32 %v548, 1.442695
    %v560 = vpow.pop %v559
    %v561 = vmul.f32 %v549, 1.442695
    %v562 = vpow.pop %v561
    %v563 = vmul.f32 %v550, 1.442695
    %v564 = vpow.pop %v563
    %v565 = vmul.f32 %v530, %v552
    %v566 = vmul.f32 %v531, %v554
    %v567 = vmul.f32 %v532, %v556
    %v568 = vmul.f32 %v533, %v558
    %v569 = vmul.f32 %v534, %v560
    %v570 = vmul.f32 %v535, %v562
    %v571 = vmul.f32 %v536, %v564
    %v572 = vsub.f32 1.0, %v565
    %v573 = vsub.f32 1.0, %v566
    %v574 = vsub.f32 1.0, %v567
    %v575 = vsub.f32 1.0, %v568
    %v576 = vsub.f32 1.0, %v569
    %v577 = vsub.f32 1.0, %v570
    %v578 = vsub.f32 1.0, %v571
    %v579 = vmul.f32 %v418, %v572
    %v580 = vmul.f32 %v419, %v573
    %v581 = vmul.f32 %v420, %v574
    %v582 = vmul.f32 %v421, %v575
    %v583 = vmul.f32 %v422, %v576
    %v584 = vmul.f32 %v423, %v577
    %v585 = vmul.f32 %v424, %v578
    %v586 = vmul.f32 %v579, %v579
    %v587 = vmul.f32 %v580, %v580
    %v588 = vmul.f32 %v581, %v581
    %v589 = vmul.f32 %v582, %v582
    %v590 = vmul.f32 %v583, %v583
    %v591 = vmul.f32 %v584, %v584
    %v592 = vmul.f32 %v585, %v585
    %v593 = vsub.f32 1.0, %v586
    %v594 = vsub.f32 1.0, %v587
    %v595 = vsub.f32 1.0, %v588
    %v596 = vsub.f32 1.0, %v589
    %v597 = vsub.f32 1.0, %v590
    %v598 = vsub.f32 1.0, %v591
    %v599 = vsub.f32 1.0, %v592
    %v600 = vld [vmem:[%s6] sm:$0x1]
    %v601 = vld [vmem:[#allocation2] sm:$0x1]
    %603 = vset.pattern.permute.xlu0 0
    %604 = vperm.xlu0 %603, %v601
    %v605 = vpop.permute.xlu0 %604
    %v607 = vlaneseq
    %v608 = vshrl.u32 %v607, 7
    %v609 = vsub.s32 0, %v608
    %v610 = vrot.slane %v605, %v609
    %vm611 = vcmask 457728
    %v613 = vsel %vm611, %v600, 0
    %615 = vmatprep.subr.mxu0 0.0
    %616 = vmatpush1.msra.mxu0 %v579
    %617 = vmatprep.subr.mxu0 0.0
    %618 = vmatpush1.msra.mxu0 %v580
    %619 = vmatprep.subr.mxu0 0.0
    %620 = vmatpush1.msra.mxu0 %v581
    %621 = vmatprep.subr.mxu0 0.0
    %622 = vmatpush1.msra.mxu0 %v582
    %623 = vmatprep.subr.mxu0 0.0
    %624 = vmatpush1.msra.mxu0 %v583
    %625 = vmatprep.subr.mxu0 0.0
    %626 = vmatpush1.msra.mxu0 %v584
    %627 = vmatprep.subr.mxu0 0.0
    %628 = vmatpush1.msra.mxu0 %v585
    %629 = vmatprep.subr.mxu0 0.0
    %630 = vmatpush1.msra.mxu0 0.0
    %631 = vmatprep.subr.mxu0 0.0
    %632 = vmatpush1.msra.mxu0 0.0
    %633 = vmatprep.subr.mxu0 0.0
    %634 = vmatpush1.msra.mxu0 0.0
    %635 = vmatprep.subr.mxu0 0.0
    %636 = vmatpush1.msra.mxu0 0.0
    %637 = vmatprep.subr.mxu0 0.0
    %638 = vmatpush1.msra.mxu0 0.0
    %639 = vmatprep.subr.mxu0 0.0
    %640 = vmatpush1.msra.mxu0 0.0
    %641 = vmatprep.subr.mxu0 0.0
    %642 = vmatpush1.msra.mxu0 0.0
    %643 = vmatprep.subr.mxu0 0.0
    %644 = vmatpush1.msra.mxu0 0.0
    %645 = vmatprep.subr.mxu0 0.0
    %646 = vmatpush1.msra.mxu0 0.0
    %647 = vmatprep.subr.mxu0 0.0
    %648 = vmatpush1.msra.mxu0 0.0
    %649 = vmatprep.subr.mxu0 0.0
    %650 = vmatpush1.msra.mxu0 0.0
    %651 = vmatprep.subr.mxu0 0.0
    %652 = vmatpush1.msra.mxu0 0.0
    %653 = vmatprep.subr.mxu0 0.0
    %654 = vmatpush1.msra.mxu0 0.0
    %655 = vmatprep.subr.mxu0 0.0
    %656 = vmatpush1.msra.mxu0 0.0
    %657 = vmatprep.subr.mxu0 0.0
    %658 = vmatpush1.msra.mxu0 0.0
    %659 = vmatprep.subr.mxu0 0.0
    %660 = vmatpush1.msra.mxu0 0.0
    %661 = vmatprep.subr.mxu0 0.0
    %662 = vmatpush1.msra.mxu0 0.0
    %663 = vmatprep.subr.mxu0 0.0
    %664 = vmatpush1.msra.mxu0 0.0
    %665 = vmatprep.subr.mxu0 0.0
    %666 = vmatpush1.msra.mxu0 0.0
    %667 = vmatprep.subr.mxu0 0.0
    %668 = vmatpush1.msra.mxu0 0.0
    %669 = vmatprep.subr.mxu0 0.0
    %670 = vmatpush1.msra.mxu0 0.0
    %671 = vmatprep.subr.mxu0 0.0
    %672 = vmatpush1.msra.mxu0 0.0
    %673 = vmatprep.subr.mxu0 0.0
    %674 = vmatpush1.msra.mxu0 0.0
    %675 = vmatprep.subr.mxu0 0.0
    %676 = vmatpush1.msra.mxu0 0.0
    %677 = vmatprep.subr.mxu0 0.0
    %678 = vmatpush1.msra.mxu0 0.0
    %679 = vmatprep.mubr.f32.mxu0 0.0
    %680 = vmatmul.mubr.f32.gmra.mrb[0].mxu0 %v613
    %v681 = vpop.f32.mrb[0].mxu0
    %v682 = vadd.f32 %v610, %v681
    %v683 = vpop.f32.mrb[0].mxu0
    %684 = vdwg.mxu0
    %v685 = vld [vmem:[%s7] sm:$0x1]
    %v687 = vsel %vm611, %v685, 0
    %689 = vmatprep.subr.mxu0 0.0
    %690 = vmatpush1.msra.mxu0 %v593
    %691 = vmatprep.subr.mxu0 0.0
    %692 = vmatpush1.msra.mxu0 %v594
    %693 = vmatprep.subr.mxu0 0.0
    %694 = vmatpush1.msra.mxu0 %v595
    %695 = vmatprep.subr.mxu0 0.0
    %696 = vmatpush1.msra.mxu0 %v596
    %697 = vmatprep.subr.mxu0 0.0
    %698 = vmatpush1.msra.mxu0 %v597
    %699 = vmatprep.subr.mxu0 0.0
    %700 = vmatpush1.msra.mxu0 %v598
    %701 = vmatprep.subr.mxu0 0.0
    %702 = vmatpush1.msra.mxu0 %v599
    %703 = vmatprep.subr.mxu0 0.0
    %704 = vmatpush1.msra.mxu0 0.0
    %705 = vmatprep.subr.mxu0 0.0
    %706 = vmatpush1.msra.mxu0 0.0
    %707 = vmatprep.subr.mxu0 0.0
    %708 = vmatpush1.msra.mxu0 0.0
    %709 = vmatprep.subr.mxu0 0.0
    %710 = vmatpush1.msra.mxu0 0.0
    %711 = vmatprep.subr.mxu0 0.0
    %712 = vmatpush1.msra.mxu0 0.0
    %713 = vmatprep.subr.mxu0 0.0
    %714 = vmatpush1.msra.mxu0 0.0
    %715 = vmatprep.subr.mxu0 0.0
    %716 = vmatpush1.msra.mxu0 0.0
    %717 = vmatprep.subr.mxu0 0.0
    %718 = vmatpush1.msra.mxu0 0.0
    %719 = vmatprep.subr.mxu0 0.0
    %720 = vmatpush1.msra.mxu0 0.0
    %721 = vmatprep.subr.mxu0 0.0
    %722 = vmatpush1.msra.mxu0 0.0
    %723 = vmatprep.subr.mxu0 0.0
    %724 = vmatpush1.msra.mxu0 0.0
    %725 = vmatprep.subr.mxu0 0.0
    %726 = vmatpush1.msra.mxu0 0.0
    %727 = vmatprep.subr.mxu0 0.0
    %728 = vmatpush1.msra.mxu0 0.0
    %729 = vmatprep.subr.mxu0 0.0
    %730 = vmatpush1.msra.mxu0 0.0
    %731 = vmatprep.subr.mxu0 0.0
    %732 = vmatpush1.msra.mxu0 0.0
    %733 = vmatprep.subr.mxu0 0.0
    %734 = vmatpush1.msra.mxu0 0.0
    %735 = vmatprep.subr.mxu0 0.0
    %736 = vmatpush1.msra.mxu0 0.0
    %737 = vmatprep.subr.mxu0 0.0
    %738 = vmatpush1.msra.mxu0 0.0
    %739 = vmatprep.subr.mxu0 0.0
    %740 = vmatpush1.msra.mxu0 0.0
    %741 = vmatprep.subr.mxu0 0.0
    %742 = vmatpush1.msra.mxu0 0.0
    %743 = vmatprep.subr.mxu0 0.0
    %744 = vmatpush1.msra.mxu0 0.0
    %745 = vmatprep.subr.mxu0 0.0
    %746 = vmatpush1.msra.mxu0 0.0
    %747 = vmatprep.subr.mxu0 0.0
    %748 = vmatpush1.msra.mxu0 0.0
    %749 = vmatprep.subr.mxu0 0.0
    %750 = vmatpush1.msra.mxu0 0.0
    %751 = vmatprep.subr.mxu0 0.0
    %752 = vmatpush1.msra.mxu0 0.0
    %753 = vmatprep.mubr.f32.mxu0 0.0
    %754 = vmatmul.mubr.f32.gmra.mrb[0].mxu0 %v687
    %v755 = vpop.f32.mrb[0].mxu0
    %v756 = vadd.f32 1.0, %v755
    %v757 = vpop.f32.mrb[0].mxu0
    %758 = vdwg.mxu0
    %759 = vst [vmem:[#allocation3] sm:$0x1] %v682
    %v760 = vld [vmem:[%s1] sm:$0x1]
    %v761 = vsub.f32 %v760, %v682
    %v762 = vrcp.pop %v756
    %v763 = vmul.f32 %v756, %v762
    %v764 = vsub.f32 2.0, %v763
    %v765 = vmul.f32 %v762, %v764
    %v766 = vmul.f32 %v761, %v761
    %v767 = vmul.f32 %v766, %v765
    %v768 = vlog2.pop %v756
    %v769 = vmul.f32 %v768, 0.6931472
    %v770 = vadd.f32 %v767, %v769
    %v771 = vadd.f32 %v770, 1.837877
    %v772 = vmul.f32 %v771, 0.5
    %v773 = vlaneseq
    %v774 = vand.u32 %v773, 127
    %s775 = smul.u32 0, 128
    %v776 = vstv %s775
    %v777 = vadd.s32 %v774, %v776
    %vm778 = vcmp.lt.s32.totalorder %v777, 8
    %v779 = vsel %vm778, %v772, 0.0
    %vm780 = vcmask 1040384
    %v781 = vsel %vm780, %v779, 0.0
    %782 = vadd.xlane.f32.xlu0 %v781
    %v783 = vpop.xlane.xlu0 %782
    %v784 = vadd.f32 %v783, 0.0
    %v785 = vlaneseq
    %v786 = vshrl.u32 %v785, 7
    %v787 = vsub.s32 0, %v786
    %v788 = vrot.slane %v784, %v787
    %789 = vst [vmem:[#allocation5] sm:$0xff] %v788
    // Predicated region
    $region38: #{tpu_custom_call.1} parent=1 // pred_check
      _
    $region39: #{tpu_custom_call.1} parent=1 // pred_check_branch
      %791 = sbr.rel (0) target = $region41
    $region40: #{tpu_custom_call.1} parent=1 // pred_region
      %s793 = ssub.s32 16, 16
      %794 = vsyncadd [#allocation4], %s793
      %s796 = sshll.u32 [#allocation3], 4
      %s797 = int_to_ptr.vmem [resolvable:$true] %s796
      %799 = dma.vmem_to_hbm [thread:$0]  %s797, 16, %s9, [#allocation4]
    $region41: #{tpu_custom_call.1} parent=1 // pred_fallthru
      _
    // Predicated region
    $region42: #{tpu_custom_call.1} parent=1 // pred_check
      _
    $region43: #{tpu_custom_call.1} parent=1 // pred_check_branch
      %801 = sbr.rel (0) target = $region45
    $region44: #{tpu_custom_call.1} parent=1 // pred_region
      %s803 = ssub.s32 128, 128
      %804 = vsyncadd [#allocation6], %s803
      %s806 = sshll.u32 [#allocation5], 4
      %s807 = int_to_ptr.vmem [resolvable:$true] %s806
      %809 = dma.vmem_to_hbm [thread:$0]  %s807, 128, %s10, [#allocation6]
    $region45: #{tpu_custom_call.1} parent=1 // pred_fallthru
      _
    // Predicated region
    $region46: #{tpu_custom_call.1} parent=1 // pred_check
      _
    $region47: #{tpu_custom_call.1} parent=1 // pred_check_branch
      %811 = sbr.rel (0) target = $region49
    $region48: #{tpu_custom_call.1} parent=1 // pred_region
      %812 = dma.done [#allocation4], 16
    $region49: #{tpu_custom_call.1} parent=1 // pred_fallthru
      _
    // Predicated region
    $region50: #{tpu_custom_call.1} parent=1 // pred_check
      _
    $region51: #{tpu_custom_call.1} parent=1 // pred_check_branch
      %814 = sbr.rel (0) target = $region53
    $region52: #{tpu_custom_call.1} parent=1 // pred_region
      %815 = dma.done [#allocation6], 128
    $region53: #{tpu_custom_call.1} parent=1 // pred_fallthru
      _
    %816 = vsyncpa [#allocation4], 1
    %817 = vsyncpa [#allocation6], 1

</llo_original>
